<compile_context>
chip_gen: v5e
topology: v5e:2x2
jax: 0.10.0
libtpu: 0.0.40
codegen_flags: <defaults>
</compile_context>

<pallas_src>
import functools

import jax
import jax.numpy as jnp
from jax.experimental import pallas as pl
from jax.experimental.pallas import tpu as pltpu


# --------------------------------------------------------------------------- #
# Kernel
# --------------------------------------------------------------------------- #
def _dueling_kernel(h_ref,
                    w1f_ref, b1f_ref,
                    w2a_ref, b2a_ref,
                    w2v_ref, b2v_ref,
                    out_ref,
                    sum_ref,
                    *, seq_len, hidden_size):
    """Grid = (batch tiles, sequence tiles); grid axis 1 is the S-reduction."""
    k = pl.program_id(1)

    @pl.when(k == 0)
    def _():
        sum_ref[...] = jnp.zeros_like(sum_ref)

    # Partial sum over this sequence tile; f32 accumulation fused into the
    # reduce (avoids materializing an f32 copy of the streamed (tB, tS, H) tile).
    sum_ref[...] += jnp.sum(h_ref[...], axis=1, dtype=jnp.float32)     # (tB, H)

    @pl.when(k == pl.num_programs(1) - 1)
    def _():
        H = hidden_size
        x = sum_ref[...] * jnp.float32(1.0 / seq_len)                  # mean over S
        w_dtype = w1f_ref.dtype

        # Fused first layers of both heads: one MXU matmul -> (tB, 2H), f32 acc.
        h1 = jnp.dot(x.astype(w_dtype), w1f_ref[...],
                     preferred_element_type=jnp.float32)
        h1 = jnp.maximum(h1 + b1f_ref[...].astype(jnp.float32), 0.0)
        a1 = h1[:, :H]                                                 # advantage
        v1 = h1[:, H:]                                                 # value

        # Advantage second layer: (tB, A) MXU matmul, f32 accumulate.
        adv = jnp.dot(a1.astype(w_dtype), w2a_ref[...],
                      preferred_element_type=jnp.float32)
        adv = adv + b2a_ref[...].astype(jnp.float32)

        # Value second layer (output width 1): lane reduce instead of MXU.
        val = jnp.sum(v1 * w2v_ref[...], axis=-1, keepdims=True) + b2v_ref[0, 0]

        # value + advantage - advantage.mean(dim=1, keepdim=True)
        q = val + adv - jnp.mean(adv, axis=1, keepdims=True)
        out_ref[...] = q.astype(out_ref.dtype)


# --------------------------------------------------------------------------- #
# Tiling / VMEM budgeting helpers
# --------------------------------------------------------------------------- #
def _vmem_budget_bytes():
    """Generation-aware VMEM budget: ~75% of the physical per-core VMEM
    (48 MiB on v7x's 64 MiB, 96 MiB on v5e/v6e's 128 MiB)."""
    phys = None
    try:
        phys = getattr(pltpu.get_tpu_info(), "vmem_capacity_bytes", None)
    except Exception:
        phys = None
    if not phys:
        phys = 64 * 1024 * 1024          # conservative default = v7x per-TC VMEM
    return int(phys) * 3 // 4


def _tile_candidates(total, multiple, cap):
    """Divisors of `total` (<= cap) that are multiples of `multiple`, descending.
    The full dimension is always a legal block size, so it is always included."""
    cands = []
    if total <= cap:
        cands.append(total)
    for d in range(min(total, cap), 0, -1):
        if total % d == 0 and d % multiple == 0 and d not in cands:
            cands.append(d)
    if not cands:
        cands.append(total)
    return cands


def _select_tiles(B, S, H, A, itemsize, resident_bytes, vmem_budget):
    """Largest (tB, tS) such that the double-buffered hidden tile plus resident
    weights, the f32 accumulator, and the double-buffered output fit the budget."""
    sub = 16 if itemsize < 4 else 8          # sublane packing for bf16
    tb_cands = _tile_candidates(B, 8, 128)
    # v7x megacore: prefer tile sizes giving >= 2 grid steps on the "parallel"
    # batch axis so both TensorCores get work.
    tb_cands = ([t for t in tb_cands if B // t >= 2]
                + [t for t in tb_cands if B // t < 2])
    ts_cands = _tile_candidates(S, sub, 4096)
    fallback = (min(tb_cands), min(ts_cands))
    for tb in tb_cands:
        fixed = resident_bytes + tb * H * 4 + 2 * tb * A * 4
        for ts in ts_cands:
            if 2 * tb * ts * H * itemsize + fixed <= vmem_budget:
                return tb, ts
    return fallback


def _resident_spec(shape):
    """Grid-invariant VMEM block (constant index map): fetched once; request
    single buffering so it does not burn VMEM on a useless second buffer."""
    index_map = lambda i, k: (0,) * len(shape)
    try:
        return pl.BlockSpec(shape, index_map, pipeline_mode=pl.Buffered(1))
    except Exception:                        # older jax without pipeline_mode
        return pl.BlockSpec(shape, index_map)


# --------------------------------------------------------------------------- #
# One-time parameter preparation (hoisted out of the per-call wrapper)
# --------------------------------------------------------------------------- #
def prepare_params(params, compute_dtype=jnp.bfloat16):
    """Fuse the two head-1 layers and cast the MXU-resident weights to the
    compute dtype. Call once; reuse the result across forward calls."""
    H = params["w1a"].shape[0]
    return {
        "w1f": jnp.concatenate([params["w1a"], params["w1v"]], axis=1)
                  .astype(compute_dtype),                               # (H, 2H)
        "b1f": jnp.concatenate([params["b1a"], params["b1v"]], axis=1)
                  .astype(compute_dtype),                               # (1, 2H)
        "w2a": params["w2a"].astype(compute_dtype),                     # (H, A)
        "b2a": params["b2a"].astype(compute_dtype),                     # (1, A)
        "w2v_row": params["w2v"].reshape(1, H).astype(jnp.float32),     # (1, H)
        "b2v": params["b2v"].reshape(1, 1).astype(jnp.float32),         # SMEM scalar
    }


# --------------------------------------------------------------------------- #
# Forward wrapper
# --------------------------------------------------------------------------- #
def dueling_dqn_forward(hidden, prep):
    """hidden: (B, S, H) encoder last_hidden_state (bf16 or f32).
    prep: output of prepare_params(). Returns (B, A) f32 q-values."""
    B, S, H = hidden.shape
    A = prep["w2a"].shape[1]
    itemsize = jnp.dtype(hidden.dtype).itemsize

    def _nbytes(x):
        return x.size * jnp.dtype(x.dtype).itemsize

    # Conservative: count resident weights as double-buffered even though
    # single buffering is requested for them.
    resident_bytes = 2 * sum(_nbytes(prep[k])
                             for k in ("w1f", "b1f", "w2a", "b2a", "w2v_row"))

    budget = _vmem_budget_bytes()
    tB, tS = _select_tiles(B, S, H, A, itemsize, resident_bytes, budget)
    grid = (B // tB, S // tS)

    kernel = functools.partial(_dueling_kernel, seq_len=S, hidden_size=H)

    flops = B * S * H + 2 * B * H * (2 * H + A) + 6 * B * H
    bytes_accessed = (B * S * H * itemsize
                      + sum(_nbytes(prep[k]) for k in prep)
                      + B * A * 4)

    return pl.pallas_call(
        kernel,
        out_shape=jax.ShapeDtypeStruct((B, A), jnp.float32),
        grid=grid,
        in_specs=[
            pl.BlockSpec((tB, tS, H), lambda i, k: (i, k, 0)),   # hidden stream
            _resident_spec((H, 2 * H)),                          # fused W1
            _resident_spec((1, 2 * H)),                          # fused b1
            _resident_spec((H, A)),                              # w2a
            _resident_spec((1, A)),                              # b2a
            _resident_spec((1, H)),                              # w2v as a row
            pl.BlockSpec(memory_space=pltpu.MemorySpace.SMEM),   # b2v scalar
        ],
        out_specs=pl.BlockSpec((tB, A), lambda i, k: (i, 0)),
        scratch_shapes=[pltpu.VMEM((tB, H), jnp.float32)],       # f32 seq-sum acc
        compiler_params=pltpu.CompilerParams(
            dimension_semantics=("parallel", "arbitrary"),
            vmem_limit_bytes=budget),
        cost_estimate=pl.CostEstimate(
            flops=flops, transcendentals=0, bytes_accessed=bytes_accessed),
    )(hidden, prep["w1f"], prep["b1f"], prep["w2a"], prep["b2a"],
      prep["w2v_row"], prep["b2v"])


# --------------------------------------------------------------------------- #
# Pure-JAX reference (original module semantics)
# --------------------------------------------------------------------------- #
def reference_forward(hidden, params):
    x = jnp.mean(hidden.astype(jnp.float32), axis=1)
    a1 = jnp.maximum(x @ params["w1a"] + params["b1a"], 0.0)
    adv = a1 @ params["w2a"] + params["b2a"]
    v1 = jnp.maximum(x @ params["w1v"] + params["b1v"], 0.0)
    val = v1 @ params["w2v"] + params["b2v"]
    return val + adv - jnp.mean(adv, axis=1, keepdims=True)


if __name__ == "__main__":
    # Small, forward-consistent shapes.
    B = 2          # batch
    S = 8          # sequence length (encoder tokens)
    H = 32         # hidden_size
    A = 16         # action_size
    VOCAB = 64     # synthetic token vocabulary for the stand-in encoder

    key = jax.random.PRNGKey(0)
    keys = jax.random.split(key, 10)

    # Deterministic parameter init (synthetic, not a checkpoint load).
    params = {
        "w1a": jax.random.normal(keys[0], (H, H), jnp.float32) * 0.1,
        "b1a": jax.random.normal(keys[1], (1, H), jnp.float32) * 0.1,
        "w2a": jax.random.normal(keys[2], (H, A), jnp.float32) * 0.1,
        "b2a": jax.random.normal(keys[3], (1, A), jnp.float32) * 0.1,
        "w1v": jax.random.normal(keys[4], (H, H), jnp.float32) * 0.1,
        "b1v": jax.random.normal(keys[5], (1, H), jnp.float32) * 0.1,
        "w2v": jax.random.normal(keys[6], (H, 1), jnp.float32) * 0.1,
        "b2v": jax.random.normal(keys[7], (1, 1), jnp.float32) * 0.1,
    }
    embedding = jax.random.normal(keys[8], (VOCAB, H), jnp.float32) * 0.1

    # "state" == input_ids fed to the encoder.
    state = jax.random.randint(keys[9], (B, S), 0, VOCAB, dtype=jnp.int32)

    # Encoder stand-in (plain JAX glue): embedding lookup -> last_hidden_state,
    # streamed to the kernel in bf16 (the kernel accumulates in f32).
    hidden = jnp.take(embedding, state, axis=0).astype(jnp.bfloat16)   # (B, S, H)

    prep = prepare_params(params, compute_dtype=jnp.bfloat16)          # one-time
    q = jax.block_until_ready(dueling_dqn_forward(hidden, prep))

    # Reference in f32 on the same bf16-stored hidden states and weights.
    _bf = lambda v: v.astype(jnp.bfloat16).astype(jnp.float32)
    params_ref = dict(params,
                      w1a=_bf(params["w1a"]), b1a=_bf(params["b1a"]),
                      w2a=_bf(params["w2a"]), b2a=_bf(params["b2a"]),
                      w1v=_bf(params["w1v"]), b1v=_bf(params["b1v"]))
    q_ref = reference_forward(hidden.astype(jnp.float32), params_ref)

    assert q.shape == (B, A)
    assert jnp.allclose(q, q_ref, atol=1e-2, rtol=1e-2), "mismatch vs JAX reference"

    print("KERNEL_OK")
</pallas_src>

<mosaic_0001>
module attributes {stable_mosaic.version = 11 : i64} {
  func.func @_dueling_kernel(%arg0: i32, %arg1: i32, %arg2: memref<2x8x32xbf16, #tpu.memory_space<vmem>>, %arg3: memref<32x64xbf16, #tpu.memory_space<vmem>>, %arg4: memref<1x64xbf16, #tpu.memory_space<vmem>>, %arg5: memref<32x16xbf16, #tpu.memory_space<vmem>>, %arg6: memref<1x16xbf16, #tpu.memory_space<vmem>>, %arg7: memref<1x32xf32, #tpu.memory_space<vmem>>, %arg8: memref<1x1xf32, #tpu.memory_space<smem>>, %arg9: memref<2x16xf32, #tpu.memory_space<vmem>>, %arg10: memref<2x32xf32, #tpu.memory_space<vmem>>) attributes {dimension_semantics = [#tpu.dimension_semantics<parallel>, #tpu.dimension_semantics<arbitrary>], iteration_bounds = array<i64: 1, 1>, scalar_prefetch = 0 : i64, scratch_operands = 1 : i64, tpu.core_type = #tpu.core_type<tc>, window_params = [{transform_indices = @transform_0, window_bounds = array<i64: 2, 8, 32>}, {pipeline_mode = #tpu.pipeline_mode<synchronous>, transform_indices = @transform_1, window_bounds = array<i64: 32, 64>}, {pipeline_mode = #tpu.pipeline_mode<synchronous>, transform_indices = @transform_2, window_bounds = array<i64: 1, 64>}, {pipeline_mode = #tpu.pipeline_mode<synchronous>, transform_indices = @transform_3, window_bounds = array<i64: 32, 16>}, {pipeline_mode = #tpu.pipeline_mode<synchronous>, transform_indices = @transform_4, window_bounds = array<i64: 1, 16>}, {pipeline_mode = #tpu.pipeline_mode<synchronous>, transform_indices = @transform_5, window_bounds = array<i64: 1, 32>}, {transform_indices = @transform_6, window_bounds = array<i64: 1, 1>}, {transform_indices = @transform_7, window_bounds = array<i64: 2, 16>}]} {
    %c0_i32 = arith.constant 0 : i32
    %0 = arith.cmpi eq, %arg1, %c0_i32 : i32
    %1 = arith.extui %0 : i1 to i32
    %c0_i32_0 = arith.constant 0 : i32
    %2 = arith.cmpi ne, %1, %c0_i32_0 : i32
    scf.if %2 {
      %cst_9 = arith.constant 0.000000e+00 : f32
      %12 = vector.broadcast %cst_9 : f32 to vector<2x32xf32>
      %c0_10 = arith.constant 0 : index
      %c0_11 = arith.constant 0 : index
      %13 = vector.load %arg10[%c0_10, %c0_11] : memref<2x32xf32, #tpu.memory_space<vmem>>, vector<2x32xf32>
      tpu.vector_store %arg10[%c0_10, %c0_11], %12 {strides = array<i32>} : memref<2x32xf32, #tpu.memory_space<vmem>>, vector<2x32xf32>,
    } else {
    }
    %c0 = arith.constant 0 : index
    %c0_1 = arith.constant 0 : index
    %3 = vector.load %arg10[%c0, %c0_1] : memref<2x32xf32, #tpu.memory_space<vmem>>, vector<2x32xf32>
    %c0_2 = arith.constant 0 : index
    %c0_3 = arith.constant 0 : index
    %c0_4 = arith.constant 0 : index
    %4 = vector.load %arg2[%c0_2, %c0_3, %c0_4] : memref<2x8x32xbf16, #tpu.memory_space<vmem>>, vector<2x8x32xbf16>
    %5 = arith.extf %4 : vector<2x8x32xbf16> to vector<2x8x32xf32>
    %cst = arith.constant dense<0.000000e+00> : vector<2x32xf32>
    %6 = vector.multi_reduction <add>, %5, %cst [1] : vector<2x8x32xf32> to vector<2x32xf32>
    %7 = arith.addf %3, %6 : vector<2x32xf32>
    %c0_5 = arith.constant 0 : index
    %c0_6 = arith.constant 0 : index
    %8 = vector.load %arg10[%c0_5, %c0_6] : memref<2x32xf32, #tpu.memory_space<vmem>>, vector<2x32xf32>
    tpu.vector_store %arg10[%c0_5, %c0_6], %7 {strides = array<i32>} : memref<2x32xf32, #tpu.memory_space<vmem>>, vector<2x32xf32>,
    %c0_i32_7 = arith.constant 0 : i32
    %9 = arith.cmpi eq, %arg1, %c0_i32_7 : i32
    %10 = arith.extui %9 : i1 to i32
    %c0_i32_8 = arith.constant 0 : i32
    %11 = arith.cmpi ne, %10, %c0_i32_8 : i32
    scf.if %11 {
      %c0_9 = arith.constant 0 : index
      %c0_10 = arith.constant 0 : index
      %12 = vector.load %arg10[%c0_9, %c0_10] : memref<2x32xf32, #tpu.memory_space<vmem>>, vector<2x32xf32>
      %cst_11 = arith.constant 1.250000e-01 : f32
      %13 = vector.broadcast %cst_11 : f32 to vector<2x32xf32>
      %14 = arith.mulf %12, %13 : vector<2x32xf32>
      %15 = arith.truncf %14 : vector<2x32xf32> to vector<2x32xbf16>
      %c0_12 = arith.constant 0 : index
      %c0_13 = arith.constant 0 : index
      %16 = vector.load %arg3[%c0_12, %c0_13] : memref<32x64xbf16, #tpu.memory_space<vmem>>, vector<32x64xbf16>
      %cst_14 = arith.constant dense<0.000000e+00> : vector<2x64xf32>
      %17 = tpu.matmul %15, %16, %cst_14 {dimension_numbers = #tpu.dot_dimension_numbers<[1], [0], [0], [1], [0, 0, 1, 1], [], []>} : vector<2x32xbf16>, vector<32x64xbf16>, vector<2x64xf32> -> vector<2x64xf32>
      %c0_15 = arith.constant 0 : index
      %c0_16 = arith.constant 0 : index
      %18 = vector.load %arg4[%c0_15, %c0_16] : memref<1x64xbf16, #tpu.memory_space<vmem>>, vector<1x64xbf16>
      %19 = arith.extf %18 : vector<1x64xbf16> to vector<1x64xf32>
      %20 = vector.broadcast %19 : vector<1x64xf32> to vector<2x64xf32>
      %21 = arith.addf %17, %20 : vector<2x64xf32>
      %cst_17 = arith.constant 0.000000e+00 : f32
      %22 = vector.broadcast %cst_17 : f32 to vector<2x64xf32>
      %23 = arith.maximumf %21, %22 : vector<2x64xf32>
      %24 = vector.extract_strided_slice %23 {offsets = [0, 0], sizes = [2, 32], strides = [1, 1]} : vector<2x64xf32> to vector<2x32xf32>
      %25 = vector.extract_strided_slice %23 {offsets = [0, 32], sizes = [2, 32], strides = [1, 1]} : vector<2x64xf32> to vector<2x32xf32>
      %26 = arith.truncf %24 : vector<2x32xf32> to vector<2x32xbf16>
      %c0_18 = arith.constant 0 : index
      %c0_19 = arith.constant 0 : index
      %27 = vector.load %arg5[%c0_18, %c0_19] : memref<32x16xbf16, #tpu.memory_space<vmem>>, vector<32x16xbf16>
      %cst_20 = arith.constant dense<0.000000e+00> : vector<2x16xf32>
      %28 = tpu.matmul %26, %27, %cst_20 {dimension_numbers = #tpu.dot_dimension_numbers<[1], [0], [0], [1], [0, 0, 1, 1], [], []>} : vector<2x32xbf16>, vector<32x16xbf16>, vector<2x16xf32> -> vector<2x16xf32>
      %c0_21 = arith.constant 0 : index
      %c0_22 = arith.constant 0 : index
      %29 = vector.load %arg6[%c0_21, %c0_22] : memref<1x16xbf16, #tpu.memory_space<vmem>>, vector<1x16xbf16>
      %30 = arith.extf %29 : vector<1x16xbf16> to vector<1x16xf32>
      %31 = vector.broadcast %30 : vector<1x16xf32> to vector<2x16xf32>
      %32 = arith.addf %28, %31 : vector<2x16xf32>
      %c0_23 = arith.constant 0 : index
      %c0_24 = arith.constant 0 : index
      %33 = vector.load %arg7[%c0_23, %c0_24] : memref<1x32xf32, #tpu.memory_space<vmem>>, vector<1x32xf32>
      %34 = vector.broadcast %33 : vector<1x32xf32> to vector<2x32xf32>
      %35 = arith.mulf %25, %34 : vector<2x32xf32>
      %cst_25 = arith.constant dense<0.000000e+00> : vector<2xf32>
      %36 = vector.multi_reduction <add>, %35, %cst_25 [1] : vector<2x32xf32> to vector<2xf32>
      %37 = vector.shape_cast %36 : vector<2xf32> to vector<2x1xf32>
      %c0_26 = arith.constant 0 : index
      %c0_27 = arith.constant 0 : index
      %38 = memref.load %arg8[%c0_26, %c0_27] : memref<1x1xf32, #tpu.memory_space<smem>>
      %39 = vector.broadcast %38 : f32 to vector<2x1xf32>
      %40 = arith.addf %37, %39 : vector<2x1xf32>
      %41 = vector.broadcast %40 : vector<2x1xf32> to vector<2x16xf32>
      %42 = arith.addf %41, %32 : vector<2x16xf32>
      %cst_28 = arith.constant dense<0.000000e+00> : vector<2xf32>
      %43 = vector.multi_reduction <add>, %32, %cst_28 [1] : vector<2x16xf32> to vector<2xf32>
      %44 = vector.shape_cast %43 : vector<2xf32> to vector<2x1xf32>
      %cst_29 = arith.constant 1.600000e+01 : f32
      %45 = vector.broadcast %cst_29 : f32 to vector<2x1xf32>
      %46 = arith.divf %44, %45 : vector<2x1xf32>
      %47 = vector.broadcast %46 : vector<2x1xf32> to vector<2x16xf32>
      %48 = arith.subf %42, %47 : vector<2x16xf32>
      %c0_30 = arith.constant 0 : index
      %c0_31 = arith.constant 0 : index
      %49 = vector.load %arg9[%c0_30, %c0_31] : memref<2x16xf32, #tpu.memory_space<vmem>>, vector<2x16xf32>
      tpu.vector_store %arg9[%c0_30, %c0_31], %48 {strides = array<i32>} : memref<2x16xf32, #tpu.memory_space<vmem>>, vector<2x16xf32>,
    } else {
    }
    return
  }
  func.func @transform_0(%arg0: i32, %arg1: i32) -> (i32, i32, i32) {
    %c0_i32 = arith.constant 0 : i32
    %c0_i32_0 = arith.constant 0 : i32
    return %arg0, %arg1, %c0_i32 : i32, i32, i32
  }
  func.func @transform_1(%arg0: i32, %arg1: i32) -> (i32, i32) {
    %c0_i32 = arith.constant 0 : i32
    %c0_i32_0 = arith.constant 0 : i32
    %c0_i32_1 = arith.constant 0 : i32
    return %c0_i32, %c0_i32_0 : i32, i32
  }
  func.func @transform_2(%arg0: i32, %arg1: i32) -> (i32, i32) {
    %c0_i32 = arith.constant 0 : i32
    %c0_i32_0 = arith.constant 0 : i32
    %c0_i32_1 = arith.constant 0 : i32
    return %c0_i32, %c0_i32_0 : i32, i32
  }
  func.func @transform_3(%arg0: i32, %arg1: i32) -> (i32, i32) {
    %c0_i32 = arith.constant 0 : i32
    %c0_i32_0 = arith.constant 0 : i32
    %c0_i32_1 = arith.constant 0 : i32
    return %c0_i32, %c0_i32_0 : i32, i32
  }
  func.func @transform_4(%arg0: i32, %arg1: i32) -> (i32, i32) {
    %c0_i32 = arith.constant 0 : i32
    %c0_i32_0 = arith.constant 0 : i32
    %c0_i32_1 = arith.constant 0 : i32
    return %c0_i32, %c0_i32_0 : i32, i32
  }
  func.func @transform_5(%arg0: i32, %arg1: i32) -> (i32, i32) {
    %c0_i32 = arith.constant 0 : i32
    %c0_i32_0 = arith.constant 0 : i32
    %c0_i32_1 = arith.constant 0 : i32
    return %c0_i32, %c0_i32_0 : i32, i32
  }
  func.func @transform_6(%arg0: i32, %arg1: i32) -> (i32, i32) {
    %c0_i32 = arith.constant 0 : i32
    %c0_i32_0 = arith.constant 0 : i32
    %c0_i32_1 = arith.constant 0 : i32
    return %c0_i32, %c0_i32_0 : i32, i32
  }
  func.func @transform_7(%arg0: i32, %arg1: i32) -> (i32, i32) {
    %c0_i32 = arith.constant 0 : i32
    %c0_i32_0 = arith.constant 0 : i32
    return %arg0, %c0_i32 : i32, i32
  }
}

</mosaic_0001>

<llo_original>
// kernel: tpu_custom_call.1
$region0: #{tpu_custom_call.1}
  #allocation0 [shape = 'u32[]', space=smem, size = 0x4, offset = 0x4, fixed_abs, tag = 'smem constant byte address 0x4 - core index']
  #allocation1 [shape = 'u32[72,128]{1,0:T(1,128)}', space=vmem, size = 0x9000, scoped, tag = 'internal scratch']
  #allocation2 [shape = 'f32[2,32]{1,0:T(2,128)}', space=vmem, size = 0x400, scoped, tag = 'scratch operand']
  #allocation3 [shape = 'f32[1,1]{1,0:T(1,128)S(6)}', space=smem, size = 0x200, scoped, tag = 'scoped memory for tpu_custom_call.1']
  %s0 = inlined_call_operand.vmem [shape: bf16[2,8,32], index: 0, kind: input, shape index: {}]
  %s1 = inlined_call_operand.vmem [shape: bf16[32,64], index: 1, kind: input, shape index: {}]
  %s2 = inlined_call_operand.vmem [shape: bf16[1,64], index: 2, kind: input, shape index: {}]
  %s3 = inlined_call_operand.vmem [shape: bf16[32,16], index: 3, kind: input, shape index: {}]
  %s4 = inlined_call_operand.vmem [shape: bf16[1,16], index: 4, kind: input, shape index: {}]
  %s5 = inlined_call_operand.vmem [shape: f32[1,32], index: 5, kind: input, shape index: {}]
  %s6 = inlined_call_operand.<no memory space> [shape: f32[1,1], index: 6, kind: input, shape index: {}]
  %s7 = inlined_call_operand.hbm [shape: f32[2,16], index: 7, kind: output, shape index: {}]
  %s8 = sld [smem:[#allocation0]]
  $region46: #{tpu_custom_call.1} parent=0
    _
  %s10 = ssub.s32 1, %s8
  %s11 = scalar_select 0, %s10, %s8
  %12 = sst [smem:[#allocation3]] %s6
  $region1: #{tpu_custom_call.1} parent=0
    #allocation4 [shape = 'u8[1024]{0}', space=vmem, size = 0x400, scoped, tag = 'output window, operand 0, single buffered']
    #allocation5 [shape = 's32[1]{0}', space=sflag, size = 0x4, scoped, tag = 'scoped memory for tpu_custom_call.1']
    %13 = vsyncpa [#allocation5], 0
    // Predicated region
    $region2: #{tpu_custom_call.1} parent=1 // pred_check
      _
    $region3: #{tpu_custom_call.1} parent=1 // pred_check_branch
      %15 = sbr.rel (0) target = $region5
    $region4: #{tpu_custom_call.1} parent=1 // pred_region
      _
    $region5: #{tpu_custom_call.1} parent=1 // pred_fallthru
      _
    // Predicated region
    $region6: #{tpu_custom_call.1} parent=1 // pred_check
      _
    $region7: #{tpu_custom_call.1} parent=1 // pred_check_branch
      %17 = sbr.rel (0) target = $region9
    $region8: #{tpu_custom_call.1} parent=1 // pred_region
      _
    $region9: #{tpu_custom_call.1} parent=1 // pred_fallthru
      _
    // Predicated region
    $region10: #{tpu_custom_call.1} parent=1 // pred_check
      _
    $region11: #{tpu_custom_call.1} parent=1 // pred_check_branch
      %19 = sbr.rel (0) target = $region13
    $region12: #{tpu_custom_call.1} parent=1 // pred_region
      _
    $region13: #{tpu_custom_call.1} parent=1 // pred_fallthru
      _
    // Predicated region
    $region14: #{tpu_custom_call.1} parent=1 // pred_check
      _
    $region15: #{tpu_custom_call.1} parent=1 // pred_check_branch
      %21 = sbr.rel (0) target = $region17
    $region16: #{tpu_custom_call.1} parent=1 // pred_region
      _
    $region17: #{tpu_custom_call.1} parent=1 // pred_fallthru
      _
    // Predicated region
    $region18: #{tpu_custom_call.1} parent=1 // pred_check
      _
    $region19: #{tpu_custom_call.1} parent=1 // pred_check_branch
      %23 = sbr.rel (0) target = $region21
    $region20: #{tpu_custom_call.1} parent=1 // pred_region
      _
    $region21: #{tpu_custom_call.1} parent=1 // pred_fallthru
      _
    // Predicated region
    $region22: #{tpu_custom_call.1} parent=1 // pred_check
      _
    $region23: #{tpu_custom_call.1} parent=1 // pred_check_branch
      %25 = sbr.rel (0) target = $region25
    $region24: #{tpu_custom_call.1} parent=1 // pred_region
      _
    $region25: #{tpu_custom_call.1} parent=1 // pred_fallthru
      _
    // Predicated region
    $region26: #{tpu_custom_call.1} parent=1 // pred_check
      _
    $region27: #{tpu_custom_call.1} parent=1 // pred_check_branch
      %27 = sbr.rel (0) target = $region29
    $region28: #{tpu_custom_call.1} parent=1 // pred_region
      _
    $region29: #{tpu_custom_call.1} parent=1 // pred_fallthru
      _
    %p29 = scmp.eq.s32.totalorder 0, 0
    // Predicated region
    $region30: #{tpu_custom_call.1} parent=1 // pred_check
      %p30 = pneg %p29
    $region31: #{tpu_custom_call.1} parent=1 // pred_check_branch
      %32 = sbr.rel (%p30) target = $region33
    $region32: #{tpu_custom_call.1} parent=1 // pred_region
      %vm33 = vcmask 254976
      %34 = vst.msk [vmem:[#allocation2] sm:$0x3] %vm33, 0.0
    $region33: #{tpu_custom_call.1} parent=1 // pred_fallthru
      _
    %v35 = vld [vmem:[#allocation2] sm:$0x3]
    %v36 = vld [vmem:[%s0] sm:$0xf]
    %v37 = vld [vmem:[%s0 + $0x4] sm:$0xf]
    %v38 = vunpack.c.l.bf16 %v36
    %v39 = vunpack.c.l.bf16 %v37
    %vm40 = vcmask 261120
    %v41 = vsel %vm40, %v38, 0.0
    %v42 = vrot.slane %v41, 4
    %v43 = vadd.f32 %v41, %v42
    %v44 = vrot.slane %v43, 2
    %v45 = vadd.f32 %v43, %v44
    %v46 = vrot.slane %v45, 1
    %v47 = vadd.f32 %v45, %v46
    %v48 = vsel %vm40, %v39, 0.0
    %v49 = vrot.slane %v48, 4
    %v50 = vadd.f32 %v48, %v49
    %v51 = vrot.slane %v50, 2
    %v52 = vadd.f32 %v50, %v51
    %v53 = vrot.slane %v52, 1
    %v54 = vadd.f32 %v52, %v53
    %vm57 = vcmask 1041409
    %v58 = vsel %vm57, %v54, %v47
    %v60 = vadd.f32 %v35, %v58
    %vm61 = vcmask 254976
    %62 = vst.msk [vmem:[#allocation2] sm:$0x3] %vm61, %v60
    // Predicated region
    $region34: #{tpu_custom_call.1} parent=1 // pred_check
      %p63 = pneg %p29
    $region35: #{tpu_custom_call.1} parent=1 // pred_check_branch
      %65 = sbr.rel (%p63) target = $region37
    $region36: #{tpu_custom_call.1} parent=1 // pred_region
      %v66 = vld [vmem:[#allocation2] sm:$0x3]
      %v67 = vmul.f32 %v66, 0.125
      %v68 = vpack.c.bf16 %v67, %v67
      %v69 = vld [vmem:[%s1] sm:$0xf]
      %v70 = vld [vmem:[%s1 + $0x4] sm:$0xf]
      %v71 = vld [vmem:[%s1 + $0x8] sm:$0xf]
      %v72 = vld [vmem:[%s1 + $0xc] sm:$0xf]
      %v73 = vld [vmem:[%s2] sm:$0x1]
      %v74 = vunpack.c.l.bf16 %v73
      %v75 = vperm.slane %v74, 0
      %v80 = vunpack.c.l.b16 %v69
      %v81 = vunpack.c.l.b16 %v70
      %v82 = vunpack.c.l.b16 %v71
      %v83 = vunpack.c.l.b16 %v72
      %v84 = vpack.c.b16 %v81, %v80
      %v85 = vpack.c.b16 %v83, %v82
      %v89 = vsel %vm40, %v68, 0
      %91 = vmatpush.bf16.msra.mxu0 0
      %92 = vmatpush.bf16.msra.mxu0 0
      %93 = vmatpush.bf16.msra.mxu0 0
      %94 = vmatpush.bf16.msra.mxu0 0
      %95 = vmatpush.bf16.msra.mxu0 0
      %96 = vmatpush.bf16.msra.mxu0 0
      %97 = vmatpush.bf16.msra.mxu0 %v85
      %98 = vmatpush.bf16.msra.mxu0 %v84
      %99 = vmatmul.bf16.gmra.mxu0 %v89
      %v100 = vpop.f32.mrf.mxu0
      %v101 = vadd.f32 %v75, %v100
      %v102 = vpop.f32.mrf.mxu0
      %103 = vdwg.mxu0
      %v104 = vmax.f32 %v101, 0.0
      %v105 = vpack.c.bf16 %v104, %v104
      %v106 = vld [vmem:[%s3] sm:$0xf]
      %v107 = vld [vmem:[%s3 + $0x4] sm:$0xf]
      %v108 = vld [vmem:[%s3 + $0x8] sm:$0xf]
      %v109 = vld [vmem:[%s3 + $0xc] sm:$0xf]
      %v110 = vld [vmem:[%s4] sm:$0x1]
      %v111 = vunpack.c.l.bf16 %v110
      %v112 = vperm.slane %v111, 0
      %v117 = vunpack.c.l.b16 %v106
      %v118 = vunpack.c.l.b16 %v107
      %v119 = vunpack.c.l.b16 %v108
      %v120 = vunpack.c.l.b16 %v109
      %v121 = vpack.c.b16 %v118, %v117
      %v122 = vpack.c.b16 %v120, %v119
      %v126 = vsel %vm40, %v105, 0
      %128 = vmatpush.bf16.msra.mxu0 0
      %129 = vmatpush.bf16.msra.mxu0 0
      %130 = vmatpush.bf16.msra.mxu0 0
      %131 = vmatpush.bf16.msra.mxu0 0
      %132 = vmatpush.bf16.msra.mxu0 0
      %133 = vmatpush.bf16.msra.mxu0 0
      %134 = vmatpush.bf16.msra.mxu0 %v122
      %135 = vmatpush.bf16.msra.mxu0 %v121
      %136 = vmatmul.bf16.gmra.mxu0 %v126
      %v137 = vpop.f32.mrf.mxu0
      %v138 = vadd.f32 %v112, %v137
      %v139 = vpop.f32.mrf.mxu0
      %140 = vdwg.mxu0
      %v141 = vld [vmem:[%s5] sm:$0x1]
      %v143 = vperm.slane %v141, 0
      %144 = vrot.lane.b32.xlu0 %v143, 32
      %v145 = vpop.permute.xlu0 %144
      %v147 = vmul.f32 %v104, %v145
      %149 = vrot.lane.b32.xlu0 %v147, 96
      %v150 = vpop.permute.xlu0 %149
      %v152 = vsel %vm61, %v150, 0.0
      %153 = vadd.xlane.f32.xlu0 %v152
      %v154 = vpop.xlane.xlu0 %153
      %s155 = sld [smem:[#allocation3]]
      %v156 = vstv %s155
      %v157 = vadd.f32 %v154, %v156
      %v158 = vadd.f32 %v157, %v138
      %vm159 = vcmask 123904
      %v160 = vsel %vm159, %v138, 0.0
      %161 = vadd.xlane.f32.xlu0 %v160
      %v162 = vpop.xlane.xlu0 %161
      %v163 = vrcp.pop 16.0
      %v164 = vmul.f32 16.0, %v163
      %v165 = vsub.f32 1.0, %v164
      %v166 = vmul.f32 %v163, %v165
      %v167 = vadd.f32 %v163, %v166
      %vm168 = vweird.f32 %v163
      %v169 = vsel %vm168, %v163, %v167
      %v170 = vmul.f32 %v162, %v169
      %v171 = vsub.f32 %v158, %v170
      %172 = vst.msk [vmem:[#allocation4] sm:$0x3] %vm159, %v171
    $region37: #{tpu_custom_call.1} parent=1 // pred_fallthru
      _
    // Predicated region
    $region38: #{tpu_custom_call.1} parent=1 // pred_check
      _
    $region39: #{tpu_custom_call.1} parent=1 // pred_check_branch
      %174 = sbr.rel (0) target = $region41
    $region40: #{tpu_custom_call.1} parent=1 // pred_region
      %176 = vsyncadd [#allocation5], 0
      %s178 = sshll.u32 [#allocation4], 4
      %s179 = int_to_ptr.vmem [resolvable:$true] %s178
      %s180 = sshll.u32 %s7, 4
      %s181 = int_to_ptr.hbm [resolvable:$true] %s180
      %183 = dma.vmem_to_hbm [thread:$0]  %s179, 32, %s181, [#allocation5]
    $region41: #{tpu_custom_call.1} parent=1 // pred_fallthru
      _
    // Predicated region
    $region42: #{tpu_custom_call.1} parent=1 // pred_check
      _
    $region43: #{tpu_custom_call.1} parent=1 // pred_check_branch
      %185 = sbr.rel (0) target = $region45
    $region44: #{tpu_custom_call.1} parent=1 // pred_region
      %187 = dma.done [#allocation5], 32
    $region45: #{tpu_custom_call.1} parent=1 // pred_fallthru
      _
    %188 = vsyncpa [#allocation5], 1

</llo_original>
